<compile_context>
chip_gen: v6e
topology: v6e:2x2x1
jax: 0.10.0
libtpu: 0.0.40
codegen_flags: <defaults>
</compile_context>

<pallas_src>
import jax
import jax.numpy as jnp
from jax.experimental import pallas as pl
from jax.experimental.pallas import tpu as pltpu

VOCAB = 20
EMB = 4
OUT = 8


def _round_up(x, m):
    return ((x + m - 1) // m) * m


def net_kernel(idx_ref, tbl_ref, out_ref):
    # idx_ref: (1, TILE_N)   int32 token ids (tokens on the lane axis)
    # tbl_ref: (OUT, VOCAB)  f32 fused table T^T, where T = E @ W^T + b
    # out_ref: (OUT, TILE_N) f32 lane-dense output tile
    tbl = tbl_ref[...]                                    # (OUT, VOCAB)
    # Hoist the sublane broadcast of the index tile out of the vocab loop.
    idx_b = jnp.broadcast_to(idx_ref[...], out_ref.shape) # (OUT, TILE_N)
    acc = jnp.zeros(out_ref.shape, jnp.float32)
    # Unrolled VPU gather: 20 compares + 20 selects per tile (cheap VALU work;
    # the per-vocab lane broadcast of tbl[:, v] rides the XLU slot, which has
    # slack).  Ids outside [0, VOCAB) stay zero.
    for v in range(VOCAB):
        row = jnp.broadcast_to(tbl[:, v:v + 1], acc.shape)
        acc = jnp.where(idx_b == v, row, acc)
    out_ref[...] = acc


def net_forward(idx, embed_table, proj_w, proj_b):
    """idx: (B, S) int token ids; returns (B, S, OUT) f32 == proj(embed(idx))."""
    B, S = idx.shape
    N = B * S

    # Tokens on the lane axis; tile is a multiple of 128, capped at 1024
    # (keeps double-buffered tiles tiny even on v7x's 64 MiB VMEM).
    tile_n = min(1024, _round_up(N, 128))
    n_pad = _round_up(N, tile_n)

    idx_flat = idx.reshape(-1).astype(jnp.int32)
    idx_pad = jnp.pad(idx_flat, (0, n_pad - N)).reshape(1, n_pad)

    # Fuse embedding + linear once on the host side: T = E @ W^T + b, pass T^T.
    table_t = (embed_table @ proj_w.T + proj_b).T         # (OUT, VOCAB)

    grid = (n_pad // tile_n,)
    out = pl.pallas_call(
        net_kernel,
        out_shape=jax.ShapeDtypeStruct((OUT, n_pad), jnp.float32),
        grid=grid,
        in_specs=[
            pl.BlockSpec((1, tile_n), lambda i: (0, i)),        # idx tile
            pl.BlockSpec((OUT, VOCAB), lambda i: (0, 0)),       # fused table (resident)
        ],
        out_specs=pl.BlockSpec((OUT, tile_n), lambda i: (0, i)),
        compiler_params=pltpu.CompilerParams(
            dimension_semantics=("parallel",)),
    )(idx_pad, table_t)

    # Strip padding and restore (B, S, OUT).  Layout plumbing only.
    return out[:, :N].T.reshape(B, S, OUT)


net_forward_jit = jax.jit(net_forward)


if __name__ == "__main__":
    key = jax.random.PRNGKey(0)
    k_idx, k_emb, k_w, k_b = jax.random.split(key, 4)

    # Deterministic "parameters" (shapes from the module's __init__).
    embed_table = jax.random.normal(k_emb, (VOCAB, EMB), dtype=jnp.float32)
    # torch Linear(4, 8): weight (8, 4), bias (8,).
    proj_w = jax.random.uniform(k_w, (OUT, EMB), dtype=jnp.float32,
                                minval=-0.5, maxval=0.5)
    proj_b = jax.random.uniform(k_b, (OUT,), dtype=jnp.float32,
                                minval=-0.5, maxval=0.5)

    # Small example input consistent with the forward: batch=2, seq=8 token ids.
    idx = jax.random.randint(k_idx, (2, 8), minval=0, maxval=VOCAB,
                             dtype=jnp.int32)

    out = net_forward_jit(idx, embed_table, proj_w, proj_b)
    out = jax.block_until_ready(out)

    # Reference check in plain JAX (embedding gather + linear).
    ref = jnp.take(embed_table, idx, axis=0) @ proj_w.T + proj_b
    assert out.shape == (2, 8, OUT)
    assert jnp.allclose(out, ref, atol=1e-5, rtol=1e-5)

    print("KERNEL_OK")
</pallas_src>

<mosaic_0001>
module attributes {stable_mosaic.version = 11 : i64} {
  func.func @net_kernel(%arg0: i32, %arg1: memref<1x128xi32, #tpu.memory_space<vmem>>, %arg2: memref<8x20xf32, #tpu.memory_space<vmem>>, %arg3: memref<8x128xf32, #tpu.memory_space<vmem>>) attributes {dimension_semantics = [#tpu.dimension_semantics<parallel>], iteration_bounds = array<i64: 1>, scalar_prefetch = 0 : i64, scratch_operands = 0 : i64, tpu.core_type = #tpu.core_type<tc>, window_params = [{transform_indices = @transform_0, window_bounds = array<i64: 1, 128>}, {pipeline_mode = #tpu.pipeline_mode<synchronous>, transform_indices = @transform_1, window_bounds = array<i64: 8, 20>}, {transform_indices = @transform_2, window_bounds = array<i64: 8, 128>}]} {
    %c0 = arith.constant 0 : index
    %c0_0 = arith.constant 0 : index
    %0 = vector.load %arg2[%c0, %c0_0] : memref<8x20xf32, #tpu.memory_space<vmem>>, vector<8x20xf32>
    %c0_1 = arith.constant 0 : index
    %c0_2 = arith.constant 0 : index
    %1 = vector.load %arg1[%c0_1, %c0_2] : memref<1x128xi32, #tpu.memory_space<vmem>>, vector<1x128xi32>
    %2 = vector.shape_cast %1 : vector<1x128xi32> to vector<1x128xi32>
    %3 = vector.broadcast %2 : vector<1x128xi32> to vector<8x128xi32>
    %cst = arith.constant 0.000000e+00 : f32
    %4 = vector.broadcast %cst : f32 to vector<8x128xf32>
    %5 = vector.extract_strided_slice %0 {offsets = [0, 0], sizes = [8, 1], strides = [1, 1]} : vector<8x20xf32> to vector<8x1xf32>
    %6 = vector.shape_cast %5 : vector<8x1xf32> to vector<8x1xf32>
    %7 = vector.broadcast %6 : vector<8x1xf32> to vector<8x128xf32>
    %c0_i32 = arith.constant 0 : i32
    %8 = vector.broadcast %c0_i32 : i32 to vector<8x128xi32>
    %9 = arith.cmpi eq, %3, %8 : vector<8x128xi32>
    %10 = arith.select %9, %7, %4 : vector<8x128xi1>, vector<8x128xf32>
    %11 = vector.extract_strided_slice %0 {offsets = [0, 1], sizes = [8, 1], strides = [1, 1]} : vector<8x20xf32> to vector<8x1xf32>
    %12 = vector.shape_cast %11 : vector<8x1xf32> to vector<8x1xf32>
    %13 = vector.broadcast %12 : vector<8x1xf32> to vector<8x128xf32>
    %c1_i32 = arith.constant 1 : i32
    %14 = vector.broadcast %c1_i32 : i32 to vector<8x128xi32>
    %15 = arith.cmpi eq, %3, %14 : vector<8x128xi32>
    %16 = arith.select %15, %13, %10 : vector<8x128xi1>, vector<8x128xf32>
    %17 = vector.extract_strided_slice %0 {offsets = [0, 2], sizes = [8, 1], strides = [1, 1]} : vector<8x20xf32> to vector<8x1xf32>
    %18 = vector.shape_cast %17 : vector<8x1xf32> to vector<8x1xf32>
    %19 = vector.broadcast %18 : vector<8x1xf32> to vector<8x128xf32>
    %c2_i32 = arith.constant 2 : i32
    %20 = vector.broadcast %c2_i32 : i32 to vector<8x128xi32>
    %21 = arith.cmpi eq, %3, %20 : vector<8x128xi32>
    %22 = arith.select %21, %19, %16 : vector<8x128xi1>, vector<8x128xf32>
    %23 = vector.extract_strided_slice %0 {offsets = [0, 3], sizes = [8, 1], strides = [1, 1]} : vector<8x20xf32> to vector<8x1xf32>
    %24 = vector.shape_cast %23 : vector<8x1xf32> to vector<8x1xf32>
    %25 = vector.broadcast %24 : vector<8x1xf32> to vector<8x128xf32>
    %c3_i32 = arith.constant 3 : i32
    %26 = vector.broadcast %c3_i32 : i32 to vector<8x128xi32>
    %27 = arith.cmpi eq, %3, %26 : vector<8x128xi32>
    %28 = arith.select %27, %25, %22 : vector<8x128xi1>, vector<8x128xf32>
    %29 = vector.extract_strided_slice %0 {offsets = [0, 4], sizes = [8, 1], strides = [1, 1]} : vector<8x20xf32> to vector<8x1xf32>
    %30 = vector.shape_cast %29 : vector<8x1xf32> to vector<8x1xf32>
    %31 = vector.broadcast %30 : vector<8x1xf32> to vector<8x128xf32>
    %c4_i32 = arith.constant 4 : i32
    %32 = vector.broadcast %c4_i32 : i32 to vector<8x128xi32>
    %33 = arith.cmpi eq, %3, %32 : vector<8x128xi32>
    %34 = arith.select %33, %31, %28 : vector<8x128xi1>, vector<8x128xf32>
    %35 = vector.extract_strided_slice %0 {offsets = [0, 5], sizes = [8, 1], strides = [1, 1]} : vector<8x20xf32> to vector<8x1xf32>
    %36 = vector.shape_cast %35 : vector<8x1xf32> to vector<8x1xf32>
    %37 = vector.broadcast %36 : vector<8x1xf32> to vector<8x128xf32>
    %c5_i32 = arith.constant 5 : i32
    %38 = vector.broadcast %c5_i32 : i32 to vector<8x128xi32>
    %39 = arith.cmpi eq, %3, %38 : vector<8x128xi32>
    %40 = arith.select %39, %37, %34 : vector<8x128xi1>, vector<8x128xf32>
    %41 = vector.extract_strided_slice %0 {offsets = [0, 6], sizes = [8, 1], strides = [1, 1]} : vector<8x20xf32> to vector<8x1xf32>
    %42 = vector.shape_cast %41 : vector<8x1xf32> to vector<8x1xf32>
    %43 = vector.broadcast %42 : vector<8x1xf32> to vector<8x128xf32>
    %c6_i32 = arith.constant 6 : i32
    %44 = vector.broadcast %c6_i32 : i32 to vector<8x128xi32>
    %45 = arith.cmpi eq, %3, %44 : vector<8x128xi32>
    %46 = arith.select %45, %43, %40 : vector<8x128xi1>, vector<8x128xf32>
    %47 = vector.extract_strided_slice %0 {offsets = [0, 7], sizes = [8, 1], strides = [1, 1]} : vector<8x20xf32> to vector<8x1xf32>
    %48 = vector.shape_cast %47 : vector<8x1xf32> to vector<8x1xf32>
    %49 = vector.broadcast %48 : vector<8x1xf32> to vector<8x128xf32>
    %c7_i32 = arith.constant 7 : i32
    %50 = vector.broadcast %c7_i32 : i32 to vector<8x128xi32>
    %51 = arith.cmpi eq, %3, %50 : vector<8x128xi32>
    %52 = arith.select %51, %49, %46 : vector<8x128xi1>, vector<8x128xf32>
    %53 = vector.extract_strided_slice %0 {offsets = [0, 8], sizes = [8, 1], strides = [1, 1]} : vector<8x20xf32> to vector<8x1xf32>
    %54 = vector.shape_cast %53 : vector<8x1xf32> to vector<8x1xf32>
    %55 = vector.broadcast %54 : vector<8x1xf32> to vector<8x128xf32>
    %c8_i32 = arith.constant 8 : i32
    %56 = vector.broadcast %c8_i32 : i32 to vector<8x128xi32>
    %57 = arith.cmpi eq, %3, %56 : vector<8x128xi32>
    %58 = arith.select %57, %55, %52 : vector<8x128xi1>, vector<8x128xf32>
    %59 = vector.extract_strided_slice %0 {offsets = [0, 9], sizes = [8, 1], strides = [1, 1]} : vector<8x20xf32> to vector<8x1xf32>
    %60 = vector.shape_cast %59 : vector<8x1xf32> to vector<8x1xf32>
    %61 = vector.broadcast %60 : vector<8x1xf32> to vector<8x128xf32>
    %c9_i32 = arith.constant 9 : i32
    %62 = vector.broadcast %c9_i32 : i32 to vector<8x128xi32>
    %63 = arith.cmpi eq, %3, %62 : vector<8x128xi32>
    %64 = arith.select %63, %61, %58 : vector<8x128xi1>, vector<8x128xf32>
    %65 = vector.extract_strided_slice %0 {offsets = [0, 10], sizes = [8, 1], strides = [1, 1]} : vector<8x20xf32> to vector<8x1xf32>
    %66 = vector.shape_cast %65 : vector<8x1xf32> to vector<8x1xf32>
    %67 = vector.broadcast %66 : vector<8x1xf32> to vector<8x128xf32>
    %c10_i32 = arith.constant 10 : i32
    %68 = vector.broadcast %c10_i32 : i32 to vector<8x128xi32>
    %69 = arith.cmpi eq, %3, %68 : vector<8x128xi32>
    %70 = arith.select %69, %67, %64 : vector<8x128xi1>, vector<8x128xf32>
    %71 = vector.extract_strided_slice %0 {offsets = [0, 11], sizes = [8, 1], strides = [1, 1]} : vector<8x20xf32> to vector<8x1xf32>
    %72 = vector.shape_cast %71 : vector<8x1xf32> to vector<8x1xf32>
    %73 = vector.broadcast %72 : vector<8x1xf32> to vector<8x128xf32>
    %c11_i32 = arith.constant 11 : i32
    %74 = vector.broadcast %c11_i32 : i32 to vector<8x128xi32>
    %75 = arith.cmpi eq, %3, %74 : vector<8x128xi32>
    %76 = arith.select %75, %73, %70 : vector<8x128xi1>, vector<8x128xf32>
    %77 = vector.extract_strided_slice %0 {offsets = [0, 12], sizes = [8, 1], strides = [1, 1]} : vector<8x20xf32> to vector<8x1xf32>
    %78 = vector.shape_cast %77 : vector<8x1xf32> to vector<8x1xf32>
    %79 = vector.broadcast %78 : vector<8x1xf32> to vector<8x128xf32>
    %c12_i32 = arith.constant 12 : i32
    %80 = vector.broadcast %c12_i32 : i32 to vector<8x128xi32>
    %81 = arith.cmpi eq, %3, %80 : vector<8x128xi32>
    %82 = arith.select %81, %79, %76 : vector<8x128xi1>, vector<8x128xf32>
    %83 = vector.extract_strided_slice %0 {offsets = [0, 13], sizes = [8, 1], strides = [1, 1]} : vector<8x20xf32> to vector<8x1xf32>
    %84 = vector.shape_cast %83 : vector<8x1xf32> to vector<8x1xf32>
    %85 = vector.broadcast %84 : vector<8x1xf32> to vector<8x128xf32>
    %c13_i32 = arith.constant 13 : i32
    %86 = vector.broadcast %c13_i32 : i32 to vector<8x128xi32>
    %87 = arith.cmpi eq, %3, %86 : vector<8x128xi32>
    %88 = arith.select %87, %85, %82 : vector<8x128xi1>, vector<8x128xf32>
    %89 = vector.extract_strided_slice %0 {offsets = [0, 14], sizes = [8, 1], strides = [1, 1]} : vector<8x20xf32> to vector<8x1xf32>
    %90 = vector.shape_cast %89 : vector<8x1xf32> to vector<8x1xf32>
    %91 = vector.broadcast %90 : vector<8x1xf32> to vector<8x128xf32>
    %c14_i32 = arith.constant 14 : i32
    %92 = vector.broadcast %c14_i32 : i32 to vector<8x128xi32>
    %93 = arith.cmpi eq, %3, %92 : vector<8x128xi32>
    %94 = arith.select %93, %91, %88 : vector<8x128xi1>, vector<8x128xf32>
    %95 = vector.extract_strided_slice %0 {offsets = [0, 15], sizes = [8, 1], strides = [1, 1]} : vector<8x20xf32> to vector<8x1xf32>
    %96 = vector.shape_cast %95 : vector<8x1xf32> to vector<8x1xf32>
    %97 = vector.broadcast %96 : vector<8x1xf32> to vector<8x128xf32>
    %c15_i32 = arith.constant 15 : i32
    %98 = vector.broadcast %c15_i32 : i32 to vector<8x128xi32>
    %99 = arith.cmpi eq, %3, %98 : vector<8x128xi32>
    %100 = arith.select %99, %97, %94 : vector<8x128xi1>, vector<8x128xf32>
    %101 = vector.extract_strided_slice %0 {offsets = [0, 16], sizes = [8, 1], strides = [1, 1]} : vector<8x20xf32> to vector<8x1xf32>
    %102 = vector.shape_cast %101 : vector<8x1xf32> to vector<8x1xf32>
    %103 = vector.broadcast %102 : vector<8x1xf32> to vector<8x128xf32>
    %c16_i32 = arith.constant 16 : i32
    %104 = vector.broadcast %c16_i32 : i32 to vector<8x128xi32>
    %105 = arith.cmpi eq, %3, %104 : vector<8x128xi32>
    %106 = arith.select %105, %103, %100 : vector<8x128xi1>, vector<8x128xf32>
    %107 = vector.extract_strided_slice %0 {offsets = [0, 17], sizes = [8, 1], strides = [1, 1]} : vector<8x20xf32> to vector<8x1xf32>
    %108 = vector.shape_cast %107 : vector<8x1xf32> to vector<8x1xf32>
    %109 = vector.broadcast %108 : vector<8x1xf32> to vector<8x128xf32>
    %c17_i32 = arith.constant 17 : i32
    %110 = vector.broadcast %c17_i32 : i32 to vector<8x128xi32>
    %111 = arith.cmpi eq, %3, %110 : vector<8x128xi32>
    %112 = arith.select %111, %109, %106 : vector<8x128xi1>, vector<8x128xf32>
    %113 = vector.extract_strided_slice %0 {offsets = [0, 18], sizes = [8, 1], strides = [1, 1]} : vector<8x20xf32> to vector<8x1xf32>
    %114 = vector.shape_cast %113 : vector<8x1xf32> to vector<8x1xf32>
    %115 = vector.broadcast %114 : vector<8x1xf32> to vector<8x128xf32>
    %c18_i32 = arith.constant 18 : i32
    %116 = vector.broadcast %c18_i32 : i32 to vector<8x128xi32>
    %117 = arith.cmpi eq, %3, %116 : vector<8x128xi32>
    %118 = arith.select %117, %115, %112 : vector<8x128xi1>, vector<8x128xf32>
    %119 = vector.extract_strided_slice %0 {offsets = [0, 19], sizes = [8, 1], strides = [1, 1]} : vector<8x20xf32> to vector<8x1xf32>
    %120 = vector.shape_cast %119 : vector<8x1xf32> to vector<8x1xf32>
    %121 = vector.broadcast %120 : vector<8x1xf32> to vector<8x128xf32>
    %c19_i32 = arith.constant 19 : i32
    %122 = vector.broadcast %c19_i32 : i32 to vector<8x128xi32>
    %123 = arith.cmpi eq, %3, %122 : vector<8x128xi32>
    %124 = arith.select %123, %121, %118 : vector<8x128xi1>, vector<8x128xf32>
    %c0_3 = arith.constant 0 : index
    %c0_4 = arith.constant 0 : index
    %125 = vector.load %arg3[%c0_3, %c0_4] : memref<8x128xf32, #tpu.memory_space<vmem>>, vector<8x128xf32>
    tpu.vector_store %arg3[%c0_3, %c0_4], %124 {strides = array<i32>} : memref<8x128xf32, #tpu.memory_space<vmem>>, vector<8x128xf32>,
    return
  }
  func.func @transform_0(%arg0: i32) -> (i32, i32) {
    %c0_i32 = arith.constant 0 : i32
    %c0_i32_0 = arith.constant 0 : i32
    return %c0_i32, %arg0 : i32, i32
  }
  func.func @transform_1(%arg0: i32) -> (i32, i32) {
    %c0_i32 = arith.constant 0 : i32
    %c0_i32_0 = arith.constant 0 : i32
    %c0_i32_1 = arith.constant 0 : i32
    return %c0_i32, %c0_i32_0 : i32, i32
  }
  func.func @transform_2(%arg0: i32) -> (i32, i32) {
    %c0_i32 = arith.constant 0 : i32
    %c0_i32_0 = arith.constant 0 : i32
    return %c0_i32, %arg0 : i32, i32
  }
}

</mosaic_0001>

<llo_original>
// kernel: net_forward.1
$region0: #{net_forward.1}
  #allocation0 [shape = 'u32[]', space=smem, size = 0x4, offset = 0x4, fixed_abs, tag = 'smem constant byte address 0x4 - core index']
  #allocation1 [shape = 'u32[144,128]{1,0:T(1,128)}', space=vmem, size = 0x12000, scoped, tag = 'internal scratch']
  %s0 = inlined_call_operand.vmem [shape: s32[1,128], index: 0, kind: input, shape index: {}]
  %s1 = inlined_call_operand.vmem [shape: f32[8,20], index: 1, kind: input, shape index: {}]
  %s2 = inlined_call_operand.vmem [shape: f32[8,128], index: 2, kind: output, shape index: {}]
  %s3 = sld [smem:[#allocation0]]
  $region18: #{net_forward.1} parent=0
    _
  %s5 = ssub.s32 1, %s3
  %s6 = scalar_select 0, %s5, %s3
  // Predicated region
  $region2: #{net_forward.1} parent=0 // pred_check
    _
  $region3: #{net_forward.1} parent=0 // pred_check_branch
    %8 = sbr.rel (0) target = $region5
  $region4: #{net_forward.1} parent=0 // pred_region
    _
  $region5: #{net_forward.1} parent=0 // pred_fallthru
    _
  // Predicated region
  $region6: #{net_forward.1} parent=0 // pred_check
    _
  $region7: #{net_forward.1} parent=0 // pred_check_branch
    %10 = sbr.rel (0) target = $region9
  $region8: #{net_forward.1} parent=0 // pred_region
    _
  $region9: #{net_forward.1} parent=0 // pred_fallthru
    _
  %v11 = vld [vmem:[%s1] sm:$0xff]
  %v12 = vld [vmem:[%s0] sm:$0x1]
  %v13 = vlaneseq
  %v14 = vshrl.u32 %v13, 7
  %v15 = vsub.s32 0, %v14
  %v16 = vrot.slane %v12, %v15
  %18 = vset.pattern.permute.xlu0 0
  %19 = vperm.xlu0 %18, %v11
  %v20 = vpop.permute.xlu0 %19
  %vm22 = vcmp.eq.s32.totalorder %v16, 0
  %v23 = vsel %vm22, %v20, 0.0
  %24 = vset.pattern.permute.xlu0 1
  %25 = vperm.xlu0 %24, %v11
  %v26 = vpop.permute.xlu0 %25
  %vm28 = vcmp.eq.s32.totalorder %v16, 1
  %v29 = vsel %vm28, %v26, %v23
  %30 = vset.pattern.permute.xlu0 2
  %31 = vperm.xlu0 %30, %v11
  %v32 = vpop.permute.xlu0 %31
  %vm34 = vcmp.eq.s32.totalorder %v16, 2
  %v35 = vsel %vm34, %v32, %v29
  %36 = vset.pattern.permute.xlu0 3
  %37 = vperm.xlu0 %36, %v11
  %v38 = vpop.permute.xlu0 %37
  %vm40 = vcmp.eq.s32.totalorder %v16, 3
  %v41 = vsel %vm40, %v38, %v35
  %42 = vset.pattern.permute.xlu0 4
  %43 = vperm.xlu0 %42, %v11
  %v44 = vpop.permute.xlu0 %43
  %vm46 = vcmp.eq.s32.totalorder %v16, 4
  %v47 = vsel %vm46, %v44, %v41
  %48 = vset.pattern.permute.xlu0 5
  %49 = vperm.xlu0 %48, %v11
  %v50 = vpop.permute.xlu0 %49
  %vm52 = vcmp.eq.s32.totalorder %v16, 5
  %v53 = vsel %vm52, %v50, %v47
  %54 = vset.pattern.permute.xlu0 6
  %55 = vperm.xlu0 %54, %v11
  %v56 = vpop.permute.xlu0 %55
  %vm58 = vcmp.eq.s32.totalorder %v16, 6
  %v59 = vsel %vm58, %v56, %v53
  %60 = vset.pattern.permute.xlu0 7
  %61 = vperm.xlu0 %60, %v11
  %v62 = vpop.permute.xlu0 %61
  %vm64 = vcmp.eq.s32.totalorder %v16, 7
  %v65 = vsel %vm64, %v62, %v59
  %66 = vset.pattern.permute.xlu0 8
  %67 = vperm.xlu0 %66, %v11
  %v68 = vpop.permute.xlu0 %67
  %vm70 = vcmp.eq.s32.totalorder %v16, 8
  %v71 = vsel %vm70, %v68, %v65
  %72 = vset.pattern.permute.xlu0 9
  %73 = vperm.xlu0 %72, %v11
  %v74 = vpop.permute.xlu0 %73
  %vm76 = vcmp.eq.s32.totalorder %v16, 9
  %v77 = vsel %vm76, %v74, %v71
  %78 = vset.pattern.permute.xlu0 10
  %79 = vperm.xlu0 %78, %v11
  %v80 = vpop.permute.xlu0 %79
  %vm82 = vcmp.eq.s32.totalorder %v16, 10
  %v83 = vsel %vm82, %v80, %v77
  %84 = vset.pattern.permute.xlu0 11
  %85 = vperm.xlu0 %84, %v11
  %v86 = vpop.permute.xlu0 %85
  %vm88 = vcmp.eq.s32.totalorder %v16, 11
  %v89 = vsel %vm88, %v86, %v83
  %90 = vset.pattern.permute.xlu0 12
  %91 = vperm.xlu0 %90, %v11
  %v92 = vpop.permute.xlu0 %91
  %vm94 = vcmp.eq.s32.totalorder %v16, 12
  %v95 = vsel %vm94, %v92, %v89
  %96 = vset.pattern.permute.xlu0 13
  %97 = vperm.xlu0 %96, %v11
  %v98 = vpop.permute.xlu0 %97
  %vm100 = vcmp.eq.s32.totalorder %v16, 13
  %v101 = vsel %vm100, %v98, %v95
  %102 = vset.pattern.permute.xlu0 14
  %103 = vperm.xlu0 %102, %v11
  %v104 = vpop.permute.xlu0 %103
  %vm106 = vcmp.eq.s32.totalorder %v16, 14
  %v107 = vsel %vm106, %v104, %v101
  %108 = vset.pattern.permute.xlu0 15
  %109 = vperm.xlu0 %108, %v11
  %v110 = vpop.permute.xlu0 %109
  %vm112 = vcmp.eq.s32.totalorder %v16, 15
  %v113 = vsel %vm112, %v110, %v107
  %114 = vset.pattern.permute.xlu0 16
  %115 = vperm.xlu0 %114, %v11
  %v116 = vpop.permute.xlu0 %115
  %vm118 = vcmp.eq.s32.totalorder %v16, 16
  %v119 = vsel %vm118, %v116, %v113
  %120 = vset.pattern.permute.xlu0 17
  %121 = vperm.xlu0 %120, %v11
  %v122 = vpop.permute.xlu0 %121
  %vm124 = vcmp.eq.s32.totalorder %v16, 17
  %v125 = vsel %vm124, %v122, %v119
  %126 = vset.pattern.permute.xlu0 18
  %127 = vperm.xlu0 %126, %v11
  %v128 = vpop.permute.xlu0 %127
  %vm130 = vcmp.eq.s32.totalorder %v16, 18
  %v131 = vsel %vm130, %v128, %v125
  %132 = vset.pattern.permute.xlu0 19
  %133 = vperm.xlu0 %132, %v11
  %v134 = vpop.permute.xlu0 %133
  %vm136 = vcmp.eq.s32.totalorder %v16, 19
  %v137 = vsel %vm136, %v134, %v131
  %138 = vst [vmem:[%s2] sm:$0xff] %v137
  // Predicated region
  $region10: #{net_forward.1} parent=0 // pred_check
    _
  $region11: #{net_forward.1} parent=0 // pred_check_branch
    %140 = sbr.rel (0) target = $region13
  $region12: #{net_forward.1} parent=0 // pred_region
    _
  $region13: #{net_forward.1} parent=0 // pred_fallthru
    _
  // Predicated region
  $region14: #{net_forward.1} parent=0 // pred_check
    _
  $region15: #{net_forward.1} parent=0 // pred_check_branch
    %142 = sbr.rel (0) target = $region17
  $region16: #{net_forward.1} parent=0 // pred_region
    _
  $region17: #{net_forward.1} parent=0 // pred_fallthru
    _

</llo_original>
